<compile_context>
chip_gen: v7x
topology: tpu7x:2x2x1
jax: 0.10.0
libtpu: 0.0.40
codegen_flags: <defaults>
</compile_context>

<pallas_src>
import functools

import jax
import jax.numpy as jnp
from jax.experimental import pallas as pl
from jax.experimental.pallas import tpu as pltpu


# ----------------------------------------------------------------------------
# Kernel 1: fused QKV projection -> head-major q / k / v
# ----------------------------------------------------------------------------
def qkv_proj_kernel(x_ref, wqkv_ref, q_ref, k_ref, v_ref, *,
                    num_heads, head_size):
    """x block (1, TP, C) -> q/k/v blocks (1, H, TP, hs)."""
    hd = num_heads * head_size
    x = x_ref[0]                                     # (TP, C), compute dtype
    w = wqkv_ref[...]                                # (C, 3*HD), pre-transposed
    # Single fused MXU matmul for all of Q, K, V (f32 accumulation).
    qkv = jnp.dot(x, w, preferred_element_type=jnp.float32)     # (TP, 3*HD)
    # TODO(synk): when head_size is a multiple of 128, switch q/k/v to a
    # lane-dense (B, T, HD) layout and write whole HD-wide slabs here instead
    # of per-head slices (masked stores when hs < 128).
    for h in range(num_heads):                       # static, H is small
        lo = h * head_size
        q_ref[0, h] = qkv[:, lo:lo + head_size].astype(q_ref.dtype)
        k_ref[0, h] = qkv[:, hd + lo:hd + lo + head_size].astype(k_ref.dtype)
        v_ref[0, h] = qkv[:, 2 * hd + lo:2 * hd + lo + head_size].astype(v_ref.dtype)


# ----------------------------------------------------------------------------
# Kernel 2: flash attention (online softmax) + fused output projection
# ----------------------------------------------------------------------------
def flash_mha_kernel(q_ref, k_ref, v_ref, wo_ref, bo_ref, o_ref,
                     m_sc, l_sc, acc_sc, *,
                     num_heads, head_size, q_tile, kv_tile):
    qi = pl.program_id(1)
    ki = pl.program_id(2)
    nk = pl.num_programs(2)

    q_start = qi * q_tile
    q_last = q_start + (q_tile - 1)
    k_start = ki * kv_tile
    k_last = k_start + (kv_tile - 1)

    @pl.when(ki == 0)
    def _init():
        m_sc[...] = jnp.full_like(m_sc, -jnp.inf)
        l_sc[...] = jnp.zeros_like(l_sc)
        acc_sc[...] = jnp.zeros_like(acc_sc)

    def _attend(masked):
        q = q_ref[0]                                 # (H, TQ, hs) bf16, pre-scaled
        k = k_ref[0]                                 # (H, TK, hs) bf16
        v = v_ref[0]                                 # (H, TK, hs) bf16
        # Batched-over-heads scores on the MXU, f32 accumulation, no transposes.
        s = jnp.einsum('hqd,hkd->hqk', q, k,
                       preferred_element_type=jnp.float32)      # (H, TQ, TK)
        if masked:
            # Causal mask from global positions (diagonal-straddling tiles only).
            q_pos = q_start + jax.lax.broadcasted_iota(
                jnp.int32, (q_tile, kv_tile), 0)
            k_pos = k_start + jax.lax.broadcasted_iota(
                jnp.int32, (q_tile, kv_tile), 1)
            s = jnp.where((q_pos >= k_pos)[None, :, :], s, -jnp.inf)

        # Online softmax; all statistics in f32 (VPU-safe on v5e as well).
        m_prev = m_sc[...]
        m_new = jnp.maximum(m_prev, jnp.max(s, axis=-1, keepdims=True))
        alpha = jnp.exp(m_prev - m_new)
        p = jnp.exp(s - m_new)
        l_sc[...] = alpha * l_sc[...] + jnp.sum(p, axis=-1, keepdims=True)
        acc_sc[...] = alpha * acc_sc[...] + jnp.einsum(
            'hqk,hkd->hqd', p.astype(v.dtype), v,
            preferred_element_type=jnp.float32)
        m_sc[...] = m_new
        # TODO(synk): attention dropout skipped (inference / p = 0.0)

    # Interior tiles (fully below the diagonal): no mask work at all.
    @pl.when(k_last <= q_start)
    def _interior():
        _attend(masked=False)

    # Diagonal-straddling tiles: apply the causal mask.
    @pl.when(jnp.logical_and(k_start <= q_last, k_last > q_start))
    def _diagonal():
        _attend(masked=True)

    # Fully-above-diagonal tiles: no compute AND no DMA (clamped K/V index map).

    @pl.when(ki == nk - 1)
    def _finalize():
        # EUP approximate reciprocal -- effectively free vs a VPU divide
        # (inference-grade; use approx=False for training parity).
        inv_l = pl.reciprocal(l_sc[...], approx=True)             # (H, TQ, 1)
        # Concatenate heads on the lane dim (matches torch.cat) so the output
        # projection is ONE full-depth K = H*hs MXU matmul instead of H
        # small-K matmuls.
        attn = jnp.concatenate(
            [(acc_sc[h] * inv_l[h]).astype(wo_ref.dtype)
             for h in range(num_heads)], axis=-1)                 # (TQ, HD)
        out = jnp.dot(attn, wo_ref[...],
                      preferred_element_type=jnp.float32)         # (TQ, C)
        out = out + bo_ref[...]                                   # (1, C) broadcast
        # TODO(synk): output dropout skipped (inference / p = 0.0)
        o_ref[0] = out.astype(o_ref.dtype)


# ----------------------------------------------------------------------------
# Wrapper
# ----------------------------------------------------------------------------
def multi_head_attention(x, wq, wk, wv, wo, bo, *, num_heads, head_size,
                         compute_dtype=jnp.bfloat16,
                         q_tile=256, kv_tile=256, proj_tile=256):
    """x: (B, T, C); wq/wk/wv: (H*hs, C); wo: (C, H*hs); bo: (C,)."""
    B, T, C = x.shape
    HD = num_heads * head_size
    assert wq.shape == (HD, C) and wk.shape == (HD, C) and wv.shape == (HD, C)
    assert wo.shape == (C, HD) and bo.shape == (C,)

    TQ = min(q_tile, T)
    TK = min(kv_tile, T)
    TP = min(proj_tile, T)
    assert T % TQ == 0 and T % TK == 0 and T % TP == 0

    # Fuse + pre-transpose weights ONCE in the wrapper; fold the softmax scale
    # 1/sqrt(hs) into Wq so the kernel never scales the (H, TQ, TK) scores.
    scale = head_size ** (-0.5)
    wqkv = jnp.concatenate([wq * scale, wk, wv], axis=0).T.astype(compute_dtype)  # (C, 3HD)
    wo2 = wo.T.astype(compute_dtype)                                              # (HD, C)
    bo2 = bo.reshape(1, C).astype(jnp.float32)
    x_c = x.astype(compute_dtype)   # bf16 MXU operands, f32 accumulation

    itemsize = jnp.dtype(compute_dtype).itemsize
    proj_cost = pl.CostEstimate(
        flops=2 * B * T * C * 3 * HD,
        transcendentals=0,
        bytes_accessed=(B * T * C + C * 3 * HD + 3 * B * T * HD) * itemsize)
    # Causal => roughly half of the score / P@V work and half of the K/V reads.
    attn_cost = pl.CostEstimate(
        flops=2 * B * num_heads * T * T * head_size + 2 * B * T * HD * C,
        transcendentals=B * num_heads * T * T // 2,
        bytes_accessed=(2 * B * T * HD + HD * C) * itemsize
                       + B * T * C * x.dtype.itemsize)

    # ---- pass 1: fused QKV projection ----
    # TODO(synk): at transformer scale (esp. v7x 64 MiB VMEM) tile the weight
    # over its 3*HD output dim and/or mark it single-buffered
    # (pipeline_mode=pl.Buffered(1)); at these sizes it is a constant block.
    qkv_proj = functools.partial(qkv_proj_kernel, num_heads=num_heads,
                                 head_size=head_size)
    q, k, v = pl.pallas_call(
        qkv_proj,
        out_shape=[jax.ShapeDtypeStruct((B, num_heads, T, head_size),
                                        compute_dtype) for _ in range(3)],
        grid_spec=pltpu.PrefetchScalarGridSpec(
            num_scalar_prefetch=0,
            grid=(B, T // TP),
            in_specs=[
                pl.BlockSpec((1, TP, C), lambda b, i: (b, i, 0)),
                pl.BlockSpec((C, 3 * HD), lambda b, i: (0, 0)),
            ],
            out_specs=[
                pl.BlockSpec((1, num_heads, TP, head_size),
                             lambda b, i: (b, 0, i, 0)) for _ in range(3)
            ],
        ),
        compiler_params=pltpu.CompilerParams(
            dimension_semantics=("parallel", "parallel"),
            vmem_limit_bytes=32 * 1024 * 1024),
        cost_estimate=proj_cost,
    )(x_c, wqkv)

    # ---- pass 2: flash attention + fused output projection ----
    flash = functools.partial(flash_mha_kernel, num_heads=num_heads,
                              head_size=head_size, q_tile=TQ, kv_tile=TK)

    def q_map(b, qi, ki):
        return (b, 0, qi, 0)

    def kv_map(b, qi, ki):
        # Clamp to the last causally-needed KV block so fully-masked steps
        # re-reference the previous block -> the pipeline skips their HBM DMA.
        last_needed = (qi * TQ + (TQ - 1)) // TK
        return (b, 0, jnp.minimum(ki, last_needed), 0)

    out = pl.pallas_call(
        flash,
        out_shape=jax.ShapeDtypeStruct((B, T, C), x.dtype),
        grid_spec=pltpu.PrefetchScalarGridSpec(
            num_scalar_prefetch=0,
            grid=(B, T // TQ, T // TK),
            in_specs=[
                pl.BlockSpec((1, num_heads, TQ, head_size), q_map),
                pl.BlockSpec((1, num_heads, TK, head_size), kv_map),
                pl.BlockSpec((1, num_heads, TK, head_size), kv_map),
                pl.BlockSpec((HD, C), lambda b, qi, ki: (0, 0)),
                pl.BlockSpec((1, C), lambda b, qi, ki: (0, 0)),
            ],
            out_specs=pl.BlockSpec((1, TQ, C), lambda b, qi, ki: (b, qi, 0)),
            scratch_shapes=[
                pltpu.VMEM((num_heads, TQ, 1), jnp.float32),          # m
                pltpu.VMEM((num_heads, TQ, 1), jnp.float32),          # l
                pltpu.VMEM((num_heads, TQ, head_size), jnp.float32),  # acc
            ],
        ),
        compiler_params=pltpu.CompilerParams(
            dimension_semantics=("parallel", "parallel", "arbitrary"),
            vmem_limit_bytes=32 * 1024 * 1024),
        cost_estimate=attn_cost,
    )(q, k, v, wo2, bo2)
    return out


# ----------------------------------------------------------------------------
# Pure-JAX reference (mirrors the PyTorch forward; dropout = identity)
# ----------------------------------------------------------------------------
def reference(x, wq, wk, wv, wo, bo, *, num_heads, head_size):
    B, T, C = x.shape
    outs = []
    for h in range(num_heads):
        sl = slice(h * head_size, (h + 1) * head_size)
        q = x @ wq[sl].T
        k = x @ wk[sl].T
        v = x @ wv[sl].T
        wei = (q @ jnp.swapaxes(k, -2, -1)) * head_size ** (-0.5)
        mask = jnp.tril(jnp.ones((T, T), bool))
        wei = jnp.where(mask, wei, -jnp.inf)
        wei = jax.nn.softmax(wei, axis=-1)
        outs.append(wei @ v)
    cat = jnp.concatenate(outs, axis=-1)
    return cat @ wo.T + bo


if __name__ == "__main__":
    # Small, module-consistent shapes.
    B, T = 2, 8
    n_embed = 32
    num_heads = 4
    head_size = 8
    HD = num_heads * head_size

    key = jax.random.PRNGKey(0)
    kx, kq, kk, kv, kwo, kbo = jax.random.split(key, 6)

    x = jax.random.normal(kx, (B, T, n_embed), dtype=jnp.float32)

    # Deterministic parameters (stacked per-head Linear weights, no bias).
    wq = jax.random.normal(kq, (HD, n_embed), jnp.float32) * 0.05
    wk = jax.random.normal(kk, (HD, n_embed), jnp.float32) * 0.05
    wv = jax.random.normal(kv, (HD, n_embed), jnp.float32) * 0.05
    wo = jax.random.normal(kwo, (n_embed, HD), jnp.float32) * 0.05
    bo = jax.random.normal(kbo, (n_embed,), jnp.float32) * 0.05

    out = multi_head_attention(x, wq, wk, wv, wo, bo,
                               num_heads=num_heads, head_size=head_size)
    out = jax.block_until_ready(out)

    ref = reference(x, wq, wk, wv, wo, bo,
                    num_heads=num_heads, head_size=head_size)
    assert out.shape == (B, T, n_embed)
    err = jnp.max(jnp.abs(out - ref))
    # bf16 MXU operands (f32 accumulation / f32 softmax) => relaxed tolerance
    # vs the f32 reference.
    assert jnp.allclose(out, ref, atol=2e-2, rtol=2e-2), f"max err {err}"

    print("KERNEL_OK")
</pallas_src>

<mosaic_0001>
module attributes {stable_mosaic.version = 11 : i64} {
  func.func @qkv_proj_kernel(%arg0: i32, %arg1: i32, %arg2: memref<1x8x32xbf16, #tpu.memory_space<vmem>>, %arg3: memref<32x96xbf16, #tpu.memory_space<vmem>>, %arg4: memref<1x4x8x8xbf16, #tpu.memory_space<vmem>>, %arg5: memref<1x4x8x8xbf16, #tpu.memory_space<vmem>>, %arg6: memref<1x4x8x8xbf16, #tpu.memory_space<vmem>>) attributes {dimension_semantics = [#tpu.dimension_semantics<parallel>, #tpu.dimension_semantics<parallel>], iteration_bounds = array<i64: 2, 1>, scalar_prefetch = 0 : i64, scratch_operands = 0 : i64, tpu.core_type = #tpu.core_type<tc>, window_params = [{transform_indices = @transform_0, window_bounds = array<i64: 1, 8, 32>}, {pipeline_mode = #tpu.pipeline_mode<synchronous>, transform_indices = @transform_1, window_bounds = array<i64: 32, 96>}, {transform_indices = @transform_2, window_bounds = array<i64: 1, 4, 8, 8>}, {transform_indices = @transform_3, window_bounds = array<i64: 1, 4, 8, 8>}, {transform_indices = @transform_4, window_bounds = array<i64: 1, 4, 8, 8>}]} {
    %c0 = arith.constant 0 : index
    %c0_0 = arith.constant 0 : index
    %c0_1 = arith.constant 0 : index
    %0 = vector.load %arg2[%c0, %c0_0, %c0_1] : memref<1x8x32xbf16, #tpu.memory_space<vmem>>, vector<1x8x32xbf16>
    %1 = vector.shape_cast %0 : vector<1x8x32xbf16> to vector<8x32xbf16>
    %c0_2 = arith.constant 0 : index
    %c0_3 = arith.constant 0 : index
    %2 = vector.load %arg3[%c0_2, %c0_3] : memref<32x96xbf16, #tpu.memory_space<vmem>>, vector<32x96xbf16>
    %cst = arith.constant dense<0.000000e+00> : vector<8x96xf32>
    %3 = tpu.matmul %1, %2, %cst {dimension_numbers = #tpu.dot_dimension_numbers<[1], [0], [0], [1], [0, 0, 1, 1], [], []>} : vector<8x32xbf16>, vector<32x96xbf16>, vector<8x96xf32> -> vector<8x96xf32>
    %4 = vector.extract_strided_slice %3 {offsets = [0, 0], sizes = [8, 8], strides = [1, 1]} : vector<8x96xf32> to vector<8x8xf32>
    %5 = arith.truncf %4 : vector<8x8xf32> to vector<8x8xbf16>
    %c0_4 = arith.constant 0 : index
    %c0_5 = arith.constant 0 : index
    %c0_6 = arith.constant 0 : index
    %c0_7 = arith.constant 0 : index
    %6 = vector.load %arg4[%c0_4, %c0_5, %c0_6, %c0_7] : memref<1x4x8x8xbf16, #tpu.memory_space<vmem>>, vector<1x1x8x8xbf16>
    %7 = vector.shape_cast %6 : vector<1x1x8x8xbf16> to vector<8x8xbf16>
    %8 = vector.shape_cast %5 : vector<8x8xbf16> to vector<1x1x8x8xbf16>
    tpu.vector_store %arg4[%c0_4, %c0_5, %c0_6, %c0_7], %8 {strides = array<i32>} : memref<1x4x8x8xbf16, #tpu.memory_space<vmem>>, vector<1x1x8x8xbf16>,
    %9 = vector.extract_strided_slice %3 {offsets = [0, 32], sizes = [8, 8], strides = [1, 1]} : vector<8x96xf32> to vector<8x8xf32>
    %10 = arith.truncf %9 : vector<8x8xf32> to vector<8x8xbf16>
    %c0_8 = arith.constant 0 : index
    %c0_9 = arith.constant 0 : index
    %c0_10 = arith.constant 0 : index
    %c0_11 = arith.constant 0 : index
    %11 = vector.load %arg5[%c0_8, %c0_9, %c0_10, %c0_11] : memref<1x4x8x8xbf16, #tpu.memory_space<vmem>>, vector<1x1x8x8xbf16>
    %12 = vector.shape_cast %11 : vector<1x1x8x8xbf16> to vector<8x8xbf16>
    %13 = vector.shape_cast %10 : vector<8x8xbf16> to vector<1x1x8x8xbf16>
    tpu.vector_store %arg5[%c0_8, %c0_9, %c0_10, %c0_11], %13 {strides = array<i32>} : memref<1x4x8x8xbf16, #tpu.memory_space<vmem>>, vector<1x1x8x8xbf16>,
    %14 = vector.extract_strided_slice %3 {offsets = [0, 64], sizes = [8, 8], strides = [1, 1]} : vector<8x96xf32> to vector<8x8xf32>
    %15 = arith.truncf %14 : vector<8x8xf32> to vector<8x8xbf16>
    %c0_12 = arith.constant 0 : index
    %c0_13 = arith.constant 0 : index
    %c0_14 = arith.constant 0 : index
    %c0_15 = arith.constant 0 : index
    %16 = vector.load %arg6[%c0_12, %c0_13, %c0_14, %c0_15] : memref<1x4x8x8xbf16, #tpu.memory_space<vmem>>, vector<1x1x8x8xbf16>
    %17 = vector.shape_cast %16 : vector<1x1x8x8xbf16> to vector<8x8xbf16>
    %18 = vector.shape_cast %15 : vector<8x8xbf16> to vector<1x1x8x8xbf16>
    tpu.vector_store %arg6[%c0_12, %c0_13, %c0_14, %c0_15], %18 {strides = array<i32>} : memref<1x4x8x8xbf16, #tpu.memory_space<vmem>>, vector<1x1x8x8xbf16>,
    %19 = vector.extract_strided_slice %3 {offsets = [0, 8], sizes = [8, 8], strides = [1, 1]} : vector<8x96xf32> to vector<8x8xf32>
    %20 = arith.truncf %19 : vector<8x8xf32> to vector<8x8xbf16>
    %c0_16 = arith.constant 0 : index
    %c1 = arith.constant 1 : index
    %c0_17 = arith.constant 0 : index
    %c0_18 = arith.constant 0 : index
    %21 = vector.load %arg4[%c0_16, %c1, %c0_17, %c0_18] : memref<1x4x8x8xbf16, #tpu.memory_space<vmem>>, vector<1x1x8x8xbf16>
    %22 = vector.shape_cast %21 : vector<1x1x8x8xbf16> to vector<8x8xbf16>
    %23 = vector.shape_cast %20 : vector<8x8xbf16> to vector<1x1x8x8xbf16>
    tpu.vector_store %arg4[%c0_16, %c1, %c0_17, %c0_18], %23 {strides = array<i32>} : memref<1x4x8x8xbf16, #tpu.memory_space<vmem>>, vector<1x1x8x8xbf16>,
    %24 = vector.extract_strided_slice %3 {offsets = [0, 40], sizes = [8, 8], strides = [1, 1]} : vector<8x96xf32> to vector<8x8xf32>
    %25 = arith.truncf %24 : vector<8x8xf32> to vector<8x8xbf16>
    %c0_19 = arith.constant 0 : index
    %c1_20 = arith.constant 1 : index
    %c0_21 = arith.constant 0 : index
    %c0_22 = arith.constant 0 : index
    %26 = vector.load %arg5[%c0_19, %c1_20, %c0_21, %c0_22] : memref<1x4x8x8xbf16, #tpu.memory_space<vmem>>, vector<1x1x8x8xbf16>
    %27 = vector.shape_cast %26 : vector<1x1x8x8xbf16> to vector<8x8xbf16>
    %28 = vector.shape_cast %25 : vector<8x8xbf16> to vector<1x1x8x8xbf16>
    tpu.vector_store %arg5[%c0_19, %c1_20, %c0_21, %c0_22], %28 {strides = array<i32>} : memref<1x4x8x8xbf16, #tpu.memory_space<vmem>>, vector<1x1x8x8xbf16>,
    %29 = vector.extract_strided_slice %3 {offsets = [0, 72], sizes = [8, 8], strides = [1, 1]} : vector<8x96xf32> to vector<8x8xf32>
    %30 = arith.truncf %29 : vector<8x8xf32> to vector<8x8xbf16>
    %c0_23 = arith.constant 0 : index
    %c1_24 = arith.constant 1 : index
    %c0_25 = arith.constant 0 : index
    %c0_26 = arith.constant 0 : index
    %31 = vector.load %arg6[%c0_23, %c1_24, %c0_25, %c0_26] : memref<1x4x8x8xbf16, #tpu.memory_space<vmem>>, vector<1x1x8x8xbf16>
    %32 = vector.shape_cast %31 : vector<1x1x8x8xbf16> to vector<8x8xbf16>
    %33 = vector.shape_cast %30 : vector<8x8xbf16> to vector<1x1x8x8xbf16>
    tpu.vector_store %arg6[%c0_23, %c1_24, %c0_25, %c0_26], %33 {strides = array<i32>} : memref<1x4x8x8xbf16, #tpu.memory_space<vmem>>, vector<1x1x8x8xbf16>,
    %34 = vector.extract_strided_slice %3 {offsets = [0, 16], sizes = [8, 8], strides = [1, 1]} : vector<8x96xf32> to vector<8x8xf32>
    %35 = arith.truncf %34 : vector<8x8xf32> to vector<8x8xbf16>
    %c0_27 = arith.constant 0 : index
    %c2 = arith.constant 2 : index
    %c0_28 = arith.constant 0 : index
    %c0_29 = arith.constant 0 : index
    %36 = vector.load %arg4[%c0_27, %c2, %c0_28, %c0_29] : memref<1x4x8x8xbf16, #tpu.memory_space<vmem>>, vector<1x1x8x8xbf16>
    %37 = vector.shape_cast %36 : vector<1x1x8x8xbf16> to vector<8x8xbf16>
    %38 = vector.shape_cast %35 : vector<8x8xbf16> to vector<1x1x8x8xbf16>
    tpu.vector_store %arg4[%c0_27, %c2, %c0_28, %c0_29], %38 {strides = array<i32>} : memref<1x4x8x8xbf16, #tpu.memory_space<vmem>>, vector<1x1x8x8xbf16>,
    %39 = vector.extract_strided_slice %3 {offsets = [0, 48], sizes = [8, 8], strides = [1, 1]} : vector<8x96xf32> to vector<8x8xf32>
    %40 = arith.truncf %39 : vector<8x8xf32> to vector<8x8xbf16>
    %c0_30 = arith.constant 0 : index
    %c2_31 = arith.constant 2 : index
    %c0_32 = arith.constant 0 : index
    %c0_33 = arith.constant 0 : index
    %41 = vector.load %arg5[%c0_30, %c2_31, %c0_32, %c0_33] : memref<1x4x8x8xbf16, #tpu.memory_space<vmem>>, vector<1x1x8x8xbf16>
    %42 = vector.shape_cast %41 : vector<1x1x8x8xbf16> to vector<8x8xbf16>
    %43 = vector.shape_cast %40 : vector<8x8xbf16> to vector<1x1x8x8xbf16>
    tpu.vector_store %arg5[%c0_30, %c2_31, %c0_32, %c0_33], %43 {strides = array<i32>} : memref<1x4x8x8xbf16, #tpu.memory_space<vmem>>, vector<1x1x8x8xbf16>,
    %44 = vector.extract_strided_slice %3 {offsets = [0, 80], sizes = [8, 8], strides = [1, 1]} : vector<8x96xf32> to vector<8x8xf32>
    %45 = arith.truncf %44 : vector<8x8xf32> to vector<8x8xbf16>
    %c0_34 = arith.constant 0 : index
    %c2_35 = arith.constant 2 : index
    %c0_36 = arith.constant 0 : index
    %c0_37 = arith.constant 0 : index
    %46 = vector.load %arg6[%c0_34, %c2_35, %c0_36, %c0_37] : memref<1x4x8x8xbf16, #tpu.memory_space<vmem>>, vector<1x1x8x8xbf16>
    %47 = vector.shape_cast %46 : vector<1x1x8x8xbf16> to vector<8x8xbf16>
    %48 = vector.shape_cast %45 : vector<8x8xbf16> to vector<1x1x8x8xbf16>
    tpu.vector_store %arg6[%c0_34, %c2_35, %c0_36, %c0_37], %48 {strides = array<i32>} : memref<1x4x8x8xbf16, #tpu.memory_space<vmem>>, vector<1x1x8x8xbf16>,
    %49 = vector.extract_strided_slice %3 {offsets = [0, 24], sizes = [8, 8], strides = [1, 1]} : vector<8x96xf32> to vector<8x8xf32>
    %50 = arith.truncf %49 : vector<8x8xf32> to vector<8x8xbf16>
    %c0_38 = arith.constant 0 : index
    %c3 = arith.constant 3 : index
    %c0_39 = arith.constant 0 : index
    %c0_40 = arith.constant 0 : index
    %51 = vector.load %arg4[%c0_38, %c3, %c0_39, %c0_40] : memref<1x4x8x8xbf16, #tpu.memory_space<vmem>>, vector<1x1x8x8xbf16>
    %52 = vector.shape_cast %51 : vector<1x1x8x8xbf16> to vector<8x8xbf16>
    %53 = vector.shape_cast %50 : vector<8x8xbf16> to vector<1x1x8x8xbf16>
    tpu.vector_store %arg4[%c0_38, %c3, %c0_39, %c0_40], %53 {strides = array<i32>} : memref<1x4x8x8xbf16, #tpu.memory_space<vmem>>, vector<1x1x8x8xbf16>,
    %54 = vector.extract_strided_slice %3 {offsets = [0, 56], sizes = [8, 8], strides = [1, 1]} : vector<8x96xf32> to vector<8x8xf32>
    %55 = arith.truncf %54 : vector<8x8xf32> to vector<8x8xbf16>
    %c0_41 = arith.constant 0 : index
    %c3_42 = arith.constant 3 : index
    %c0_43 = arith.constant 0 : index
    %c0_44 = arith.constant 0 : index
    %56 = vector.load %arg5[%c0_41, %c3_42, %c0_43, %c0_44] : memref<1x4x8x8xbf16, #tpu.memory_space<vmem>>, vector<1x1x8x8xbf16>
    %57 = vector.shape_cast %56 : vector<1x1x8x8xbf16> to vector<8x8xbf16>
    %58 = vector.shape_cast %55 : vector<8x8xbf16> to vector<1x1x8x8xbf16>
    tpu.vector_store %arg5[%c0_41, %c3_42, %c0_43, %c0_44], %58 {strides = array<i32>} : memref<1x4x8x8xbf16, #tpu.memory_space<vmem>>, vector<1x1x8x8xbf16>,
    %59 = vector.extract_strided_slice %3 {offsets = [0, 88], sizes = [8, 8], strides = [1, 1]} : vector<8x96xf32> to vector<8x8xf32>
    %60 = arith.truncf %59 : vector<8x8xf32> to vector<8x8xbf16>
    %c0_45 = arith.constant 0 : index
    %c3_46 = arith.constant 3 : index
    %c0_47 = arith.constant 0 : index
    %c0_48 = arith.constant 0 : index
    %61 = vector.load %arg6[%c0_45, %c3_46, %c0_47, %c0_48] : memref<1x4x8x8xbf16, #tpu.memory_space<vmem>>, vector<1x1x8x8xbf16>
    %62 = vector.shape_cast %61 : vector<1x1x8x8xbf16> to vector<8x8xbf16>
    %63 = vector.shape_cast %60 : vector<8x8xbf16> to vector<1x1x8x8xbf16>
    tpu.vector_store %arg6[%c0_45, %c3_46, %c0_47, %c0_48], %63 {strides = array<i32>} : memref<1x4x8x8xbf16, #tpu.memory_space<vmem>>, vector<1x1x8x8xbf16>,
    return
  }
  func.func @transform_0(%arg0: i32, %arg1: i32) -> (i32, i32, i32) {
    %c0_i32 = arith.constant 0 : i32
    %c0_i32_0 = arith.constant 0 : i32
    return %arg0, %arg1, %c0_i32 : i32, i32, i32
  }
  func.func @transform_1(%arg0: i32, %arg1: i32) -> (i32, i32) {
    %c0_i32 = arith.constant 0 : i32
    %c0_i32_0 = arith.constant 0 : i32
    %c0_i32_1 = arith.constant 0 : i32
    return %c0_i32, %c0_i32_0 : i32, i32
  }
  func.func @transform_2(%arg0: i32, %arg1: i32) -> (i32, i32, i32, i32) {
    %c0_i32 = arith.constant 0 : i32
    %c0_i32_0 = arith.constant 0 : i32
    %c0_i32_1 = arith.constant 0 : i32
    return %arg0, %c0_i32, %arg1, %c0_i32_0 : i32, i32, i32, i32
  }
  func.func @transform_3(%arg0: i32, %arg1: i32) -> (i32, i32, i32, i32) {
    %c0_i32 = arith.constant 0 : i32
    %c0_i32_0 = arith.constant 0 : i32
    %c0_i32_1 = arith.constant 0 : i32
    return %arg0, %c0_i32, %arg1, %c0_i32_0 : i32, i32, i32, i32
  }
  func.func @transform_4(%arg0: i32, %arg1: i32) -> (i32, i32, i32, i32) {
    %c0_i32 = arith.constant 0 : i32
    %c0_i32_0 = arith.constant 0 : i32
    %c0_i32_1 = arith.constant 0 : i32
    return %arg0, %c0_i32, %arg1, %c0_i32_0 : i32, i32, i32, i32
  }
}

</mosaic_0001>

<llo_original>
// kernel: tpu_custom_call.1
$region0: #{tpu_custom_call.1}
  #allocation0 [shape = 'u32[]', space=smem, size = 0x4, offset = 0x4, fixed_abs, tag = 'smem constant byte address 0x4 - core index']
  #allocation1 [shape = 'u32[144,128]{1,0:T(1,128)}', space=vmem, size = 0x12000, scoped, tag = 'internal scratch']
  %s0 = inlined_call_operand.hbm [shape: bf16[2,8,32], index: 0, kind: input, shape index: {}]
  %s1 = inlined_call_operand.hbm [shape: bf16[32,96], index: 1, kind: input, shape index: {}]
  %s2 = inlined_call_operand.hbm [shape: bf16[2,4,8,8], index: 2, kind: output, shape index: {0}]
  %s3 = inlined_call_operand.hbm [shape: bf16[2,4,8,8], index: 3, kind: output, shape index: {1}]
  %s4 = inlined_call_operand.hbm [shape: bf16[2,4,8,8], index: 4, kind: output, shape index: {2}]
  %5 = xla_tuple %s2, %s3, %s4
  %s6 = sld [smem:[#allocation0]]
  $region65: #{tpu_custom_call.1} parent=0
    _
  %s8 = ssub.s32 1, %s6
  %s9 = scalar_select 0, %s8, %s6
  $region1: #{tpu_custom_call.1} parent=0
    #allocation2 [shape = 'u8[4096]{0}', space=vmem, size = 0x1000, scoped, tag = 'input window, operand 0']
    #allocation3 [shape = 's32[2]{0}', space=sflag, size = 0x8, scoped, tag = 'scoped memory for tpu_custom_call.1']
    #allocation4 [shape = 's32[2]{0}', space=sflag, size = 0x8, scoped, tag = 'scoped memory for tpu_custom_call.1']
    #allocation5 [shape = 'u8[8192]{0}', space=vmem, size = 0x2000, scoped, tag = 'input window, operand 1, single buffered']
    #allocation6 [shape = 's32[1]{0}', space=sflag, size = 0x4, scoped, tag = 'scoped memory for tpu_custom_call.1']
    #allocation7 [shape = 'u8[16384]{0}', space=vmem, size = 0x4000, scoped, tag = 'output window, operand 0']
    #allocation8 [shape = 'u8[16384]{0}', space=vmem, size = 0x4000, scoped, tag = 'output window, operand 1']
    #allocation9 [shape = 's32[2]{0}', space=sflag, size = 0x8, scoped, tag = 'scoped memory for tpu_custom_call.1']
    #allocation10 [shape = 'u8[16384]{0}', space=vmem, size = 0x4000, scoped, tag = 'output window, operand 2']
    %10 = vsyncpa [#allocation3], 0
    %s11 = scalar_lea.sflag [#allocation3], 1
    %12 = vsyncpa %s11, 0
    %13 = vsyncpa [#allocation6], 0
    %14 = vsyncpa [#allocation4], 0
    %s15 = scalar_lea.sflag [#allocation4], 1
    %16 = vsyncpa %s15, 0
    %17 = vsyncpa [#allocation9], 0
    %s18 = scalar_lea.sflag [#allocation9], 1
    %19 = vsyncpa %s18, 0
    loop: start=0, step=1, limit=4
    $region2: #{tpu_custom_call.1} parent=1 // loop_pre_header
      _
    $region3: #{tpu_custom_call.1} parent=1 // loop_header
      %s21 = sphi 0, %s25
      %p22 = scmp.ge.s32.totalorder %s21, 4
      %s28 = sphi 0, %s40
      %s29 = sphi 0, %s36
      %s30 = sphi 0, %s28
      %s31 = sphi 0, %s29
      %s32 = sphi 0, %s30
      %s33 = sphi 0, %s31
      %s45 = sphi 0, %s47
      %s48 = sphi 0, %s45
      %s49 = sphi 0, %s48
      %s65 = sphi 0, %s49
      %s69 = sphi 0, %s69
      %s71 = sphi 0, %s69
      %s72 = sphi 0, %s71
      %s86 = sphi 0, %s72
      %s94 = sphi 0, %s96
      %s97 = sphi 0, %s94
      %s98 = sphi 0, %s97
      %s114 = sphi 0, %s98
      %s122 = sphi 0, %s124
      %s125 = sphi 0, %s122
      %s126 = sphi 0, %s125
      %s142 = sphi 0, %s126
      %s150 = sphi 0, %s152
      %s153 = sphi 0, %s150
      %s154 = sphi 0, %s153
      %s170 = sphi 0, %s154
    $region4: #{tpu_custom_call.1} parent=1 // loop_header_branch
      %24 = sbr.rel (%p22) target = $region8
    $region5: #{tpu_custom_call.1} parent=1 // loop_body
      %s26 = ssub.s32 %s21, 1
      %s27 = ssub.s32 %s21, 2
      %s34 = sadd.s32 1, %s29
      %p35 = scmp.ge.s32.totalorder %s34, 1
      %s36 = scalar_select %p35, 0, %s34
      %s37 = sadd.s32 1, %s28
      %s38 = scalar_select %p35, %s37, %s28
      %p39 = scmp.ge.s32.totalorder %s38, 2
      %s40 = scalar_select %p39, 0, %s38
      %s41 = ssub.s32 %s28, %s40
      %s42 = ssub.s32 %s29, %s36
      %s43 = sor.u32 %s41, %s42
      %p44 = scmp.eq.s32.totalorder %s43, 0
      %s46 = sadd.s32 %s45, 1
      %s47 = scalar_select %p44, %s45, %s46
      %p50 = pneg %p44
      %p51 = scmp.eq.s32.totalorder %s21, 1
      %p52 = por %p50, %p51
      %p53 = scmp.ne.s32.totalorder %s45, %s48
      %p54 = scmp.eq.s32.totalorder %s21, 0
      %p55 = por %p53, %p54
      %p56 = scmp.ne.s32.totalorder %s45, %s48
      %p57 = scmp.eq.s32.totalorder %s26, 1
      %p58 = por %p56, %p57
      %p59 = scmp.ne.s32.totalorder %s48, %s49
      %p60 = scmp.eq.s32.totalorder %s26, 0
      %p61 = por %p59, %p60
      %p62 = scmp.ne.s32.totalorder %s48, %s49
      %p63 = scmp.eq.s32.totalorder %s27, 1
      %p64 = por %p62, %p63
      %p66 = scmp.ne.s32.totalorder %s49, %s65
      %p67 = scmp.eq.s32.totalorder %s27, 0
      %p68 = por %p66, %p67
      %s70 = sadd.s32 %s69, 1
      %p73 = scmp.eq.s32.totalorder %s21, 1
      %p74 = scmp.ne.s32.totalorder %s69, %s71
      %p75 = scmp.eq.s32.totalorder %s21, 0
      %p76 = por %p74, %p75
      %p77 = scmp.ne.s32.totalorder %s69, %s71
      %p78 = scmp.eq.s32.totalorder %s26, 1
      %p79 = por %p77, %p78
      %p80 = scmp.ne.s32.totalorder %s71, %s72
      %p81 = scmp.eq.s32.totalorder %s26, 0
      %p82 = por %p80, %p81
      %p83 = scmp.ne.s32.totalorder %s71, %s72
      %p84 = scmp.eq.s32.totalorder %s27, 1
      %p85 = por %p83, %p84
      %p87 = scmp.ne.s32.totalorder %s72, %s86
      %p88 = scmp.eq.s32.totalorder %s27, 0
      %p89 = por %p87, %p88
      %s90 = ssub.s32 %s28, %s40
      %s91 = ssub.s32 %s29, %s36
      %s92 = sor.u32 %s90, %s91
      %p93 = scmp.eq.s32.totalorder %s92, 0
      %s95 = sadd.s32 %s94, 1
      %s96 = scalar_select %p93, %s94, %s95
      %p99 = pneg %p93
      %p100 = scmp.eq.s32.totalorder %s21, 1
      %p101 = por %p99, %p100
      %p102 = scmp.ne.s32.totalorder %s94, %s97
      %p103 = scmp.eq.s32.totalorder %s21, 0
      %p104 = por %p102, %p103
      %p105 = scmp.ne.s32.totalorder %s94, %s97
      %p106 = scmp.eq.s32.totalorder %s26, 1
      %p107 = por %p105, %p106
      %p108 = scmp.ne.s32.totalorder %s97, %s98
      %p109 = scmp.eq.s32.totalorder %s26, 0
      %p110 = por %p108, %p109
      %p111 = scmp.ne.s32.totalorder %s97, %s98
      %p112 = scmp.eq.s32.totalorder %s27, 1
      %p113 = por %p111, %p112
      %p115 = scmp.ne.s32.totalorder %s98, %s114
      %p116 = scmp.eq.s32.totalorder %s27, 0
      %p117 = por %p115, %p116
      %s118 = ssub.s32 %s28, %s40
      %s119 = ssub.s32 %s29, %s36
      %s120 = sor.u32 %s118, %s119
      %p121 = scmp.eq.s32.totalorder %s120, 0
      %s123 = sadd.s32 %s122, 1
      %s124 = scalar_select %p121, %s122, %s123
      %p127 = pneg %p121
      %p128 = scmp.eq.s32.totalorder %s21, 1
      %p129 = por %p127, %p128
      %p130 = scmp.ne.s32.totalorder %s122, %s125
      %p131 = scmp.eq.s32.totalorder %s21, 0
      %p132 = por %p130, %p131
      %p133 = scmp.ne.s32.totalorder %s122, %s125
      %p134 = scmp.eq.s32.totalorder %s26, 1
      %p135 = por %p133, %p134
      %p136 = scmp.ne.s32.totalorder %s125, %s126
      %p137 = scmp.eq.s32.totalorder %s26, 0
      %p138 = por %p136, %p137
      %p139 = scmp.ne.s32.totalorder %s125, %s126
      %p140 = scmp.eq.s32.totalorder %s27, 1
      %p141 = por %p139, %p140
      %p143 = scmp.ne.s32.totalorder %s126, %s142
      %p144 = scmp.eq.s32.totalorder %s27, 0
      %p145 = por %p143, %p144
      %s146 = ssub.s32 %s28, %s40
      %s147 = ssub.s32 %s29, %s36
      %s148 = sor.u32 %s146, %s147
      %p149 = scmp.eq.s32.totalorder %s148, 0
      %s151 = sadd.s32 %s150, 1
      %s152 = scalar_select %p149, %s150, %s151
      %p155 = pneg %p149
      %p156 = scmp.eq.s32.totalorder %s21, 1
      %p157 = por %p155, %p156
      %p158 = scmp.ne.s32.totalorder %s150, %s153
      %p159 = scmp.eq.s32.totalorder %s21, 0
      %p160 = por %p158, %p159
      %p161 = scmp.ne.s32.totalorder %s150, %s153
      %p162 = scmp.eq.s32.totalorder %s26, 1
      %p163 = por %p161, %p162
      %p164 = scmp.ne.s32.totalorder %s153, %s154
      %p165 = scmp.eq.s32.totalorder %s26, 0
      %p166 = por %p164, %p165
      %p167 = scmp.ne.s32.totalorder %s153, %s154
      %p168 = scmp.eq.s32.totalorder %s27, 1
      %p169 = por %p167, %p168
      %p171 = scmp.ne.s32.totalorder %s154, %s170
      %p172 = scmp.eq.s32.totalorder %s27, 0
      %p173 = por %p171, %p172
      %p174 = scmp.le.s32.totalorder 1, %s21
      %p175 = scmp.lt.s32.totalorder %s21, 3
      %p176 = pnand %p174, %p175
      %p177 = pneg %p176
      // Predicated region
      $region9: #{tpu_custom_call.1} parent=5 // pred_check
        _
      $region10: #{tpu_custom_call.1} parent=5 // pred_check_branch
        %179 = sbr.rel (%p176) target = $region12
      $region11: #{tpu_custom_call.1} parent=5 // pred_region
        %s180 = ssub.s32 %s21, 1
        // Predicated region
        $region13: #{tpu_custom_call.1} parent=11 // pred_check
          %p181 = pneg %p82
        $region14: #{tpu_custom_call.1} parent=11 // pred_check_branch
          %183 = sbr.rel (%p181) target = $region16
        $region15: #{tpu_custom_call.1} parent=11 // pred_region
          %s185 = ssub.s32 256, 256
          %186 = vsyncadd [#allocation6], %s185
          %s187 = sshll.u32 [#allocation5], 4
          %s188 = int_to_ptr.vmem [resolvable:$true] %s187
          %193 = dma.hbm_to_vmem [thread:$0]  %s1, 256, %s188, [#allocation6], 64, 64, 4
        $region16: #{tpu_custom_call.1} parent=11 // pred_fallthru
          _
      $region12: #{tpu_custom_call.1} parent=5 // pred_fallthru
        _
      %p194 = scmp.lt.s32.totalorder %s21, 2
      // Predicated region
      $region17: #{tpu_custom_call.1} parent=5 // pred_check
        %p195 = pneg %p194
      $region18: #{tpu_custom_call.1} parent=5 // pred_check_branch
        %197 = sbr.rel (%p195) target = $region20
      $region19: #{tpu_custom_call.1} parent=5 // pred_region
        // Predicated region
        $region21: #{tpu_custom_call.1} parent=19 // pred_check
          %p198 = pneg %p55
        $region22: #{tpu_custom_call.1} parent=19 // pred_check_branch
          %200 = sbr.rel (%p198) target = $region24
        $region23: #{tpu_custom_call.1} parent=19 // pred_region
          %s201 = sand.u32 %s45, 1
          %s202 = scalar_lea.sflag [#allocation3], %s201
          %s203 = sand.u32 %s45, 1
          %s204 = smul.addr %s203, 4
          %s205 = scalar_lea.vmem [#allocation2], %s204
          %s207 = ssub.s32 64, 64
          %208 = vsyncadd %s202, %s207
          %s209 = sadd.s32 %s29, %s28
          %s210 = smul.addr %s209, 64
          %s211 = scalar_lea.hbm %s0, %s210
          %s213 = sshll.u32 %s205, 4
          %s214 = int_to_ptr.vmem [resolvable:$true] %s213
          %216 = dma.hbm_to_vmem [thread:$0]  %s211, 64, %s214, %s202
        $region24: #{tpu_custom_call.1} parent=19 // pred_fallthru
          _
      $region20: #{tpu_custom_call.1} parent=5 // pred_fallthru
        _
      %p217 = scmp.le.s32.totalorder 1, %s21
      %p218 = scmp.lt.s32.totalorder %s21, 3
      %p219 = pnand %p217, %p218
      %p220 = pneg %p219
      // Predicated region
      $region25: #{tpu_custom_call.1} parent=5 // pred_check
        _
      $region26: #{tpu_custom_call.1} parent=5 // pred_check_branch
        %222 = sbr.rel (%p219) target = $region28
      $region27: #{tpu_custom_call.1} parent=5 // pred_region
        %s223 = ssub.s32 %s21, 1
        %s224 = sand.u32 %s48, 1
        %s225 = scalar_lea.sflag [#allocation3], %s224
        %s226 = sand.u32 %s48, 1
        %s227 = smul.addr %s226, 4
        %s228 = scalar_lea.vmem [#allocation2], %s227
        // Predicated region
        $region29: #{tpu_custom_call.1} parent=27 // pred_check
          %p229 = pneg %p61
        $region30: #{tpu_custom_call.1} parent=27 // pred_check_branch
          %231 = sbr.rel (%p229) target = $region32
        $region31: #{tpu_custom_call.1} parent=27 // pred_region
          %232 = dma.done %s225, 64
        $region32: #{tpu_custom_call.1} parent=27 // pred_fallthru
          _
        // Predicated region
        $region33: #{tpu_custom_call.1} parent=27 // pred_check
          %p233 = pneg %p82
        $region34: #{tpu_custom_call.1} parent=27 // pred_check_branch
          %235 = sbr.rel (%p233) target = $region36
        $region35: #{tpu_custom_call.1} parent=27 // pred_region
          %236 = dma.done [#allocation6], 256
        $region36: #{tpu_custom_call.1} parent=27 // pred_fallthru
          _
        %s237 = sand.u32 %s48, 1
        %s238 = scalar_lea.sflag [#allocation3], %s237
        %s239 = sand.u32 %s48, 1
        %s240 = smul.addr %s239, 4
        %s241 = scalar_lea.vmem [#allocation2], %s240
        %p242 = pneg %p61
        %p243 = pneg %p58
        %p244 = pneg %p82
        %p245 = pneg %p79
        %p246 = pneg %p110
        %p247 = pneg %p107
        %s248 = sand.u32 %s97, 1
        %s249 = scalar_lea.sflag [#allocation4], %s248
        %s250 = sand.u32 %s97, 1
        %s251 = smul.addr %s250, 16
        %s252 = scalar_lea.vmem [#allocation7], %s251
        %p253 = pneg %p138
        %p254 = pneg %p135
        %s255 = sand.u32 %s26, 1
        %s256 = scalar_lea.sflag [#allocation9], %s255
        %s257 = sand.u32 %s125, 1
        %s258 = smul.addr %s257, 16
        %s259 = scalar_lea.vmem [#allocation8], %s258
        %p260 = pneg %p166
        %p261 = pneg %p163
        %s262 = sand.u32 %s26, 1
        %s263 = scalar_lea.sflag [#allocation9], %s262
        %s264 = sand.u32 %s153, 1
        %s265 = smul.addr %s264, 16
        %s266 = scalar_lea.vmem [#allocation10], %s265
        %v268 = vld [vmem:[%s228] sm:$0xf]
        %v269 = vld [vmem:[#allocation5] sm:$0xf]
        %v270 = vld [vmem:[#allocation5 + $0x4] sm:$0xf]
        %v271 = vld [vmem:[#allocation5 + $0x8] sm:$0xf]
        %v272 = vld [vmem:[#allocation5 + $0xc] sm:$0xf]
        %v277 = vunpack.c.l.b16 %v269
        %v278 = vunpack.c.l.b16 %v270
        %v279 = vunpack.c.l.b16 %v271
        %v280 = vunpack.c.l.b16 %v272
        %v281 = vpack.c.b16 %v278, %v277
        %v282 = vpack.c.b16 %v280, %v279
        %vm285 = vcmask 261120
        %v287 = vsel %vm285, %v268, 0
        %289 = vmatprep.subr.bf16.mxu0 0
        %290 = vmatpush1.bf16.msra.mxu0 %v281
        %291 = vmatprep.subr.bf16.mxu0 0
        %292 = vmatpush1.bf16.msra.mxu0 %v282
        %293 = vmatprep.subr.bf16.mxu0 0
        %294 = vmatpush1.bf16.msra.mxu0 0
        %295 = vmatprep.subr.bf16.mxu0 0
        %296 = vmatpush1.bf16.msra.mxu0 0
        %297 = vmatprep.subr.bf16.mxu0 0
        %298 = vmatpush1.bf16.msra.mxu0 0
        %299 = vmatprep.subr.bf16.mxu0 0
        %300 = vmatpush1.bf16.msra.mxu0 0
        %301 = vmatprep.subr.bf16.mxu0 0
        %302 = vmatpush1.bf16.msra.mxu0 0
        %303 = vmatprep.subr.bf16.mxu0 0
        %304 = vmatpush1.bf16.msra.mxu0 0
        %305 = vmatprep.subr.bf16.mxu0 0
        %306 = vmatpush1.bf16.msra.mxu0 0
        %307 = vmatprep.subr.bf16.mxu0 0
        %308 = vmatpush1.bf16.msra.mxu0 0
        %309 = vmatprep.subr.bf16.mxu0 0
        %310 = vmatpush1.bf16.msra.mxu0 0
        %311 = vmatprep.subr.bf16.mxu0 0
        %312 = vmatpush1.bf16.msra.mxu0 0
        %313 = vmatprep.subr.bf16.mxu0 0
        %314 = vmatpush1.bf16.msra.mxu0 0
        %315 = vmatprep.subr.bf16.mxu0 0
        %316 = vmatpush1.bf16.msra.mxu0 0
        %317 = vmatprep.subr.bf16.mxu0 0
        %318 = vmatpush1.bf16.msra.mxu0 0
        %319 = vmatprep.subr.bf16.mxu0 0
        %320 = vmatpush1.bf16.msra.mxu0 0
        %321 = vmatprep.mubr.bf16.mxu0 0
        %322 = vmatmul.mubr.bf16.gmra.mrb[0].mxu0 %v287
        %v323 = vpop.f32.mrb[0].mxu0
        %v324 = vadd.f32 0.0, %v323
        %v325 = vpop.f32.mrb[0].mxu0
        %v326 = vpop.f32.mrb[0].mxu0
        %v327 = vpop.f32.mrb[0].mxu0
        %328 = vdwg.mxu0
        %v329 = vpack.c.bf16 %v324, %v324
        %vm330 = vcmask 60416
        %331 = vst.msk [vmem:[%s252] sm:$0xf] %vm330, %v329
        %v333 = vunpack.c.l.b16 %v329
        %v334 = vpack.c.b16 %v333, %v333
        %335 = vrot.lane.b32.xlu0 %v334, 96
        %v336 = vpop.permute.xlu0 %335
        %338 = vst.msk [vmem:[%s259] sm:$0xf] %vm330, %v336
        %339 = vrot.lane.b32.xlu0 %v334, 64
        %v340 = vpop.permute.xlu0 %339
        %342 = vst.msk [vmem:[%s266] sm:$0xf] %vm330, %v340
        %343 = vrot.lane.b32.xlu0 %v334, 120
        %v344 = vpop.permute.xlu0 %343
        %s346 = scalar_lea.vmem %s252, 4 [#allocation7]
        %347 = vst.msk [vmem:[%s346] sm:$0xf] %vm330, %v344
        %348 = vrot.lane.b32.xlu0 %v334, 88
        %v349 = vpop.permute.xlu0 %348
        %s351 = scalar_lea.vmem %s259, 4 [#allocation8]
        %352 = vst.msk [vmem:[%s351] sm:$0xf] %vm330, %v349
        %353 = vrot.lane.b32.xlu0 %v334, 56
        %v354 = vpop.permute.xlu0 %353
        %s356 = scalar_lea.vmem %s266, 4 [#allocation10]
        %357 = vst.msk [vmem:[%s356] sm:$0xf] %vm330, %v354
        %358 = vrot.lane.b32.xlu0 %v334, 112
        %v359 = vpop.permute.xlu0 %358
        %s361 = scalar_lea.vmem %s252, 8 [#allocation7]
        %362 = vst.msk [vmem:[%s361] sm:$0xf] %vm330, %v359
        %363 = vrot.lane.b32.xlu0 %v334, 80
        %v364 = vpop.permute.xlu0 %363
        %s366 = scalar_lea.vmem %s259, 8 [#allocation8]
        %367 = vst.msk [vmem:[%s366] sm:$0xf] %vm330, %v364
        %368 = vrot.lane.b32.xlu0 %v334, 48
        %v369 = vpop.permute.xlu0 %368
        %s371 = scalar_lea.vmem %s266, 8 [#allocation10]
        %372 = vst.msk [vmem:[%s371] sm:$0xf] %vm330, %v369
        %373 = vrot.lane.b32.xlu0 %v334, 104
        %v374 = vpop.permute.xlu0 %373
        %s376 = scalar_lea.vmem %s252, 12 [#allocation7]
        %377 = vst.msk [vmem:[%s376] sm:$0xf] %vm330, %v374
        %378 = vrot.lane.b32.xlu0 %v334, 72
        %v379 = vpop.permute.xlu0 %378
        %s381 = scalar_lea.vmem %s259, 12 [#allocation8]
        %382 = vst.msk [vmem:[%s381] sm:$0xf] %vm330, %v379
        %383 = vrot.lane.b32.xlu0 %v334, 40
        %v384 = vpop.permute.xlu0 %383
        %s386 = scalar_lea.vmem %s266, 12 [#allocation10]
        %387 = vst.msk [vmem:[%s386] sm:$0xf] %vm330, %v384
        %s388 = sand.u32 %s97, 1
        %s389 = scalar_lea.sflag [#allocation4], %s388
        %s390 = sand.u32 %s97, 1
        %s391 = smul.addr %s390, 16
        %s392 = scalar_lea.vmem [#allocation7], %s391
        %s393 = sand.u32 %s26, 1
        %s394 = scalar_lea.sflag [#allocation9], %s393
        %s395 = sand.u32 %s125, 1
        %s396 = smul.addr %s395, 16
        %s397 = scalar_lea.vmem [#allocation8], %s396
        %s398 = sand.u32 %s26, 1
        %s399 = scalar_lea.sflag [#allocation9], %s398
        %s400 = sand.u32 %s153, 1
        %s401 = smul.addr %s400, 16
        %s402 = scalar_lea.vmem [#allocation10], %s401
        // Predicated region
        $region37: #{tpu_custom_call.1} parent=27 // pred_check
          %p403 = pneg %p107
        $region38: #{tpu_custom_call.1} parent=27 // pred_check_branch
          %405 = sbr.rel (%p403) target = $region40
        $region39: #{tpu_custom_call.1} parent=27 // pred_region
          %s407 = ssub.s32 256, 256
          %408 = vsyncadd %s389, %s407
          %s409 = smul.addr %s30, 4
          %s410 = sadd.s32 %s31, %s409
          %s411 = smul.addr %s410, 64
          %s412 = scalar_lea.hbm %s2, %s411
          %s413 = sshll.u32 %s392, 4
          %s414 = int_to_ptr.vmem [resolvable:$true] %s413
          %419 = dma.vmem_to_hbm [thread:$0]  %s414, 256, %s412, %s389, 64, 64, 4
        $region40: #{tpu_custom_call.1} parent=27 // pred_fallthru
          _
        // Predicated region
        $region41: #{tpu_custom_call.1} parent=27 // pred_check
          %p420 = pneg %p135
        $region42: #{tpu_custom_call.1} parent=27 // pred_check_branch
          %422 = sbr.rel (%p420) target = $region44
        $region43: #{tpu_custom_call.1} parent=27 // pred_region
          %s424 = ssub.s32 256, 256
          %425 = vsyncadd %s394, %s424
          %s426 = smul.addr %s30, 4
          %s427 = sadd.s32 %s31, %s426
          %s428 = smul.addr %s427, 64
          %s429 = scalar_lea.hbm %s3, %s428
          %s430 = sshll.u32 %s397, 4
          %s431 = int_to_ptr.vmem [resolvable:$true] %s430
          %436 = dma.vmem_to_hbm [thread:$0]  %s431, 256, %s429, %s394, 64, 64, 4
        $region44: #{tpu_custom_call.1} parent=27 // pred_fallthru
          _
        // Predicated region
        $region45: #{tpu_custom_call.1} parent=27 // pred_check
          %p437 = pneg %p163
        $region46: #{tpu_custom_call.1} parent=27 // pred_check_branch
          %439 = sbr.rel (%p437) target = $region48
        $region47: #{tpu_custom_call.1} parent=27 // pred_region
          %s441 = ssub.s32 256, 256
          %442 = vsyncadd %s399, %s441
          %s443 = smul.addr %s30, 4
          %s444 = sadd.s32 %s31, %s443
          %s445 = smul.addr %s444, 64
          %s446 = scalar_lea.hbm %s4, %s445
          %s447 = sshll.u32 %s402, 4
          %s448 = int_to_ptr.vmem [resolvable:$true] %s447
          %453 = dma.vmem_to_hbm [thread:$0]  %s448, 256, %s446, %s399, 64, 64, 4
        $region48: #{tpu_custom_call.1} parent=27 // pred_fallthru
          _
      $region28: #{tpu_custom_call.1} parent=5 // pred_fallthru
        _
      %p454 = scmp.le.s32.totalorder 2, %s21
      // Predicated region
      $region49: #{tpu_custom_call.1} parent=5 // pred_check
        %p455 = pneg %p454
      $region50: #{tpu_custom_call.1} parent=5 // pred_check_branch
        %457 = sbr.rel (%p455) target = $region52
      $region51: #{tpu_custom_call.1} parent=5 // pred_region
        %s458 = ssub.s32 %s21, 2
        // Predicated region
        $region53: #{tpu_custom_call.1} parent=51 // pred_check
          %p459 = pneg %p113
        $region54: #{tpu_custom_call.1} parent=51 // pred_check_branch
          %461 = sbr.rel (%p459) target = $region56
        $region55: #{tpu_custom_call.1} parent=51 // pred_region
          %s462 = sand.u32 %s98, 1
          %s463 = scalar_lea.sflag [#allocation4], %s462
          %s464 = sand.u32 %s98, 1
          %s465 = smul.addr %s464, 16
          %s466 = scalar_lea.vmem [#allocation7], %s465
          %467 = dma.done %s463, 256
        $region56: #{tpu_custom_call.1} parent=51 // pred_fallthru
          _
        // Predicated region
        $region57: #{tpu_custom_call.1} parent=51 // pred_check
          %p468 = pneg %p141
        $region58: #{tpu_custom_call.1} parent=51 // pred_check_branch
          %470 = sbr.rel (%p468) target = $region60
        $region59: #{tpu_custom_call.1} parent=51 // pred_region
          %s471 = sand.u32 %s27, 1
          %s472 = scalar_lea.sflag [#allocation9], %s471
          %s473 = sand.u32 %s126, 1
          %s474 = smul.addr %s473, 16
          %s475 = scalar_lea.vmem [#allocation8], %s474
          %476 = dma.done %s472, 256
        $region60: #{tpu_custom_call.1} parent=51 // pred_fallthru
          _
        // Predicated region
        $region61: #{tpu_custom_call.1} parent=51 // pred_check
          %p477 = pneg %p169
        $region62: #{tpu_custom_call.1} parent=51 // pred_check_branch
          %479 = sbr.rel (%p477) target = $region64
        $region63: #{tpu_custom_call.1} parent=51 // pred_region
          %s480 = sand.u32 %s27, 1
          %s481 = scalar_lea.sflag [#allocation9], %s480
          %s482 = sand.u32 %s154, 1
          %s483 = smul.addr %s482, 16
          %s484 = scalar_lea.vmem [#allocation10], %s483
          %485 = dma.done %s481, 256
        $region64: #{tpu_custom_call.1} parent=51 // pred_fallthru
          _
      $region52: #{tpu_custom_call.1} parent=5 // pred_fallthru
        _
    $region6: #{tpu_custom_call.1} parent=1 // loop_footer
      %s25 = sadd.s32 1, %s21
    $region7: #{tpu_custom_call.1} parent=1 // loop_footer_branch
      %20 = sbr.rel target = $region3
    $region8: #{tpu_custom_call.1} parent=1 // loop_exit
      _
    %486 = vsyncpa [#allocation3], 1
    %s487 = scalar_lea.sflag [#allocation3], 1
    %488 = vsyncpa %s487, 1
    %489 = vsyncpa [#allocation6], 1
    %490 = vsyncpa [#allocation4], 1
    %s491 = scalar_lea.sflag [#allocation4], 1
    %492 = vsyncpa %s491, 1
    %493 = vsyncpa [#allocation9], 1
    %s494 = scalar_lea.sflag [#allocation9], 1
    %495 = vsyncpa %s494, 1

</llo_original>
